<compile_context>
chip_gen: v7x
topology: tpu7x:2x2x1
jax: 0.10.0
libtpu: 0.0.40
codegen_flags: <defaults>
</compile_context>

<pallas_src>
import functools

import jax
import jax.numpy as jnp
from jax.experimental import pallas as pl
from jax.experimental.pallas import tpu as pltpu


def _cdiv(a, b):
    return -(-a // b)


def _round_up(a, b):
    return _cdiv(a, b) * b


def _conv_block_kernel(x_ref, w_ref, b_ref, o_ref, *, pool_size):
    """One M-tile of fused conv(matmul) + bias + SiLU + max-pool.

    x_ref: (TM, P, KC) im2col patches; x_ref[:, p, :] feeds conv position
           m*P + p of pooled output row m.
    w_ref: (KC, C_out)  unfolded conv weight.
    b_ref: (1, C_out)   f32 bias.
    o_ref: (TM, C_out)  pooled output tile.
    """
    w = w_ref[...]
    tm = x_ref.shape[0]
    c_out = w_ref.shape[1]
    # Hoisted: one broadcast, reused for all P planes (JAX does not CSE it).
    b = jnp.broadcast_to(b_ref[...], (tm, c_out))

    def silu_conv(p):
        acc = jnp.dot(x_ref[:, p, :], w, preferred_element_type=jnp.float32) + b
        return acc * jax.nn.sigmoid(acc)          # SiLU in f32 (EUP has slack)

    out = silu_conv(0)
    for p in range(1, pool_size):                 # MaxPool1d = elementwise max over P conv rows
        out = jnp.maximum(out, silu_conv(p))

    # TODO(synk): nn.Dropout(0.2) is identity in eval mode; a training-mode kernel
    # would draw a mask here with pltpu.prng_seed / pltpu.prng_random_bits.
    o_ref[...] = out.astype(o_ref.dtype)


def _pick_tile_rows(m_out, kc, c_out, in_bytes, out_bytes, *, pool_size,
                    vmem_budget_bytes):
    """Rows per grid step from a per-row VMEM byte model (padded to (8,128) tiles)."""
    lane, sub = 128, 8
    in_row = _round_up(pool_size, sub) * _round_up(kc, lane) * in_bytes
    out_row = _round_up(c_out, lane) * out_bytes
    f32_row = 3 * _round_up(c_out, lane) * 4          # acc / act / running-max temps
    row_bytes = 2 * in_row + 2 * out_row + f32_row    # double-buffered I/O + temps
    cap = max(8, min(4096, (vmem_budget_bytes // row_bytes) // 8 * 8))
    n_steps = max(2, _cdiv(m_out, cap))               # >=2 steps keeps both v7x cores busy
    if n_steps % 2:
        n_steps += 1                                  # even step count for 2-TC sharding
    return max(8, _round_up(_cdiv(m_out, n_steps), 8))


def conv_block_forward(x_ncl, weight, bias, *, pool_size=3,
                       matmul_dtype=jnp.bfloat16, out_dtype=None,
                       vmem_budget_bytes=20 * 1024 * 1024):
    """x_ncl: (N, C_in, L); weight: (C_out, C_in, K) [PyTorch layout]; bias: (C_out,).

    Returns (N, C_out, L // pool_size), matching the PyTorch ConvBlock in eval mode.
    """
    N, C_in, L = x_ncl.shape
    C_out, _, K = weight.shape
    P = pool_size
    pad_left = (K - 1) // 2                       # padding='same', stride 1 (odd K)
    pad_right = K - 1 - pad_left
    L_out = L // P                                # MaxPool1d floor semantics (drop tail)
    M_out = N * L_out
    KC = K * C_in
    T = L_out * P
    out_dtype = x_ncl.dtype if out_dtype is None else out_dtype

    TM = _pick_tile_rows(M_out, KC, C_out,
                         jnp.dtype(matmul_dtype).itemsize,
                         jnp.dtype(out_dtype).itemsize,
                         pool_size=P, vmem_budget_bytes=vmem_budget_bytes)

    # ---- wrapper-side im2col: contiguous layout, single materialization ------
    # patches[n*L_out + l, p, k*C_in + c] = x_padded[n, l*P + p + k, c]
    x_nlc = jnp.transpose(x_ncl, (0, 2, 1)).astype(matmul_dtype)          # (N, L, C_in) small
    x_pad = jnp.pad(x_nlc, ((0, 0), (pad_left, pad_right), (0, 0)))       # (N, L+K-1, C_in)
    patches = jnp.concatenate([x_pad[:, k:k + T, :] for k in range(K)], axis=-1)  # (N, T, KC)
    patches = patches.reshape(M_out, P, KC)                               # free reshape

    # PyTorch weight (C_out, C_in, K) -> (K*C_in, C_out), row index = k*C_in + c.
    w_mat = jnp.transpose(weight, (2, 1, 0)).reshape(KC, C_out).astype(matmul_dtype)
    b_row = bias.reshape(1, C_out).astype(jnp.float32)

    kernel = functools.partial(_conv_block_kernel, pool_size=P)
    out_flat = pl.pallas_call(
        kernel,
        out_shape=jax.ShapeDtypeStruct((M_out, C_out), out_dtype),
        grid=(pl.cdiv(M_out, TM),),
        in_specs=[
            pl.BlockSpec((TM, P, KC), lambda m: (m, 0, 0)),   # patch tile, KC unpadded (full dim)
            pl.BlockSpec((KC, C_out), lambda m: (0, 0)),      # full weights
            pl.BlockSpec((1, C_out), lambda m: (0, 0)),       # bias row
        ],
        out_specs=pl.BlockSpec((TM, C_out), lambda m: (m, 0)),
        compiler_params=pltpu.CompilerParams(
            dimension_semantics=("parallel",),
            vmem_limit_bytes=32 * 1024 * 1024),
    )(patches, w_mat, b_row)

    out = out_flat.reshape(N, L_out, C_out)
    return jnp.transpose(out, (0, 2, 1)).astype(out_dtype)               # (N, C_out, L_out)


if __name__ == "__main__":
    # Small shapes consistent with the module defaults (input_dim=4, out_dim=320,
    # kernel=15, pool=3); L=50 exercises the MaxPool floor (drops L mod 3 tail).
    N, C_in, L = 2, 4, 50
    C_out, K, P = 320, 15, 3

    key = jax.random.PRNGKey(0)
    kx, kw, kb = jax.random.split(key, 3)
    x = jax.random.normal(kx, (N, C_in, L), jnp.float32)

    # PyTorch Conv1d default init: U(-b, b), b = 1/sqrt(C_in*K).
    bound = 1.0 / (C_in * K) ** 0.5
    w = jax.random.uniform(kw, (C_out, C_in, K), jnp.float32, -bound, bound)
    b = jax.random.uniform(kb, (C_out,), jnp.float32, -bound, bound)

    out = conv_block_forward(x, w, b, pool_size=P)
    out = jax.block_until_ready(out)

    # Plain-JAX reference: same bf16 matmul inputs, f32 accumulation/epilogue,
    # conv 'same' + bias + SiLU + maxpool (dropout = eval identity).
    conv = jax.lax.conv_general_dilated(
        x.astype(jnp.bfloat16), w.astype(jnp.bfloat16),
        window_strides=(1,), padding="SAME",
        dimension_numbers=("NCH", "OIH", "NCH"),
        preferred_element_type=jnp.float32)
    conv = conv + b[None, :, None]
    act = conv * jax.nn.sigmoid(conv)
    L_out = L // P
    ref = act[:, :, : L_out * P].reshape(N, C_out, L_out, P).max(axis=-1)

    assert out.shape == ref.shape == (N, C_out, L_out)
    assert jnp.allclose(out, ref.astype(out.dtype), atol=1e-3, rtol=1e-3), (
        float(jnp.max(jnp.abs(out - ref))))
    print("KERNEL_OK")
</pallas_src>

<mosaic_0001>
module attributes {stable_mosaic.version = 11 : i64} {
  func.func @_conv_block_kernel(%arg0: i32, %arg1: memref<16x3x60xbf16, #tpu.memory_space<vmem>>, %arg2: memref<60x320xbf16, #tpu.memory_space<vmem>>, %arg3: memref<1x320xf32, #tpu.memory_space<vmem>>, %arg4: memref<16x320xf32, #tpu.memory_space<vmem>>) attributes {dimension_semantics = [#tpu.dimension_semantics<parallel>], iteration_bounds = array<i64: 2>, scalar_prefetch = 0 : i64, scratch_operands = 0 : i64, tpu.core_type = #tpu.core_type<tc>, window_params = [{transform_indices = @transform_0, window_bounds = array<i64: 16, 3, 60>}, {pipeline_mode = #tpu.pipeline_mode<synchronous>, transform_indices = @transform_1, window_bounds = array<i64: 60, 320>}, {pipeline_mode = #tpu.pipeline_mode<synchronous>, transform_indices = @transform_2, window_bounds = array<i64: 1, 320>}, {transform_indices = @transform_3, window_bounds = array<i64: 16, 320>}]} {
    %c0 = arith.constant 0 : index
    %c0_0 = arith.constant 0 : index
    %0 = vector.load %arg2[%c0, %c0_0] : memref<60x320xbf16, #tpu.memory_space<vmem>>, vector<60x320xbf16>
    %c0_1 = arith.constant 0 : index
    %c0_2 = arith.constant 0 : index
    %1 = vector.load %arg3[%c0_1, %c0_2] : memref<1x320xf32, #tpu.memory_space<vmem>>, vector<1x320xf32>
    %2 = vector.shape_cast %1 : vector<1x320xf32> to vector<1x320xf32>
    %3 = vector.broadcast %2 : vector<1x320xf32> to vector<16x320xf32>
    %c0_3 = arith.constant 0 : index
    %c0_4 = arith.constant 0 : index
    %c0_5 = arith.constant 0 : index
    %4 = vector.load %arg1[%c0_3, %c0_4, %c0_5] : memref<16x3x60xbf16, #tpu.memory_space<vmem>>, vector<16x1x60xbf16>
    %5 = vector.shape_cast %4 : vector<16x1x60xbf16> to vector<16x60xbf16>
    %cst = arith.constant dense<0.000000e+00> : vector<16x320xf32>
    %6 = tpu.matmul %5, %0, %cst {dimension_numbers = #tpu.dot_dimension_numbers<[1], [0], [0], [1], [0, 0, 1, 1], [], []>} : vector<16x60xbf16>, vector<60x320xbf16>, vector<16x320xf32> -> vector<16x320xf32>
    %7 = arith.addf %6, %3 : vector<16x320xf32>
    %8 = arith.negf %7 : vector<16x320xf32>
    %9 = math.exp %8 : vector<16x320xf32>
    %cst_6 = arith.constant 1.000000e+00 : f32
    %10 = vector.broadcast %cst_6 : f32 to vector<16x320xf32>
    %11 = arith.addf %10, %9 : vector<16x320xf32>
    %12 = arith.divf %10, %11 : vector<16x320xf32>
    %13 = arith.mulf %7, %12 : vector<16x320xf32>
    %c0_7 = arith.constant 0 : index
    %c1 = arith.constant 1 : index
    %c0_8 = arith.constant 0 : index
    %14 = vector.load %arg1[%c0_7, %c1, %c0_8] : memref<16x3x60xbf16, #tpu.memory_space<vmem>>, vector<16x1x60xbf16>
    %15 = vector.shape_cast %14 : vector<16x1x60xbf16> to vector<16x60xbf16>
    %cst_9 = arith.constant dense<0.000000e+00> : vector<16x320xf32>
    %16 = tpu.matmul %15, %0, %cst_9 {dimension_numbers = #tpu.dot_dimension_numbers<[1], [0], [0], [1], [0, 0, 1, 1], [], []>} : vector<16x60xbf16>, vector<60x320xbf16>, vector<16x320xf32> -> vector<16x320xf32>
    %17 = arith.addf %16, %3 : vector<16x320xf32>
    %18 = arith.negf %17 : vector<16x320xf32>
    %19 = math.exp %18 : vector<16x320xf32>
    %cst_10 = arith.constant 1.000000e+00 : f32
    %20 = vector.broadcast %cst_10 : f32 to vector<16x320xf32>
    %21 = arith.addf %20, %19 : vector<16x320xf32>
    %22 = arith.divf %20, %21 : vector<16x320xf32>
    %23 = arith.mulf %17, %22 : vector<16x320xf32>
    %24 = arith.maximumf %13, %23 : vector<16x320xf32>
    %c0_11 = arith.constant 0 : index
    %c2 = arith.constant 2 : index
    %c0_12 = arith.constant 0 : index
    %25 = vector.load %arg1[%c0_11, %c2, %c0_12] : memref<16x3x60xbf16, #tpu.memory_space<vmem>>, vector<16x1x60xbf16>
    %26 = vector.shape_cast %25 : vector<16x1x60xbf16> to vector<16x60xbf16>
    %cst_13 = arith.constant dense<0.000000e+00> : vector<16x320xf32>
    %27 = tpu.matmul %26, %0, %cst_13 {dimension_numbers = #tpu.dot_dimension_numbers<[1], [0], [0], [1], [0, 0, 1, 1], [], []>} : vector<16x60xbf16>, vector<60x320xbf16>, vector<16x320xf32> -> vector<16x320xf32>
    %28 = arith.addf %27, %3 : vector<16x320xf32>
    %29 = arith.negf %28 : vector<16x320xf32>
    %30 = math.exp %29 : vector<16x320xf32>
    %cst_14 = arith.constant 1.000000e+00 : f32
    %31 = vector.broadcast %cst_14 : f32 to vector<16x320xf32>
    %32 = arith.addf %31, %30 : vector<16x320xf32>
    %33 = arith.divf %31, %32 : vector<16x320xf32>
    %34 = arith.mulf %28, %33 : vector<16x320xf32>
    %35 = arith.maximumf %24, %34 : vector<16x320xf32>
    %c0_15 = arith.constant 0 : index
    %c0_16 = arith.constant 0 : index
    %36 = vector.load %arg4[%c0_15, %c0_16] : memref<16x320xf32, #tpu.memory_space<vmem>>, vector<16x320xf32>
    tpu.vector_store %arg4[%c0_15, %c0_16], %35 {strides = array<i32>} : memref<16x320xf32, #tpu.memory_space<vmem>>, vector<16x320xf32>,
    return
  }
  func.func @transform_0(%arg0: i32) -> (i32, i32, i32) {
    %c0_i32 = arith.constant 0 : i32
    %c0_i32_0 = arith.constant 0 : i32
    %c0_i32_1 = arith.constant 0 : i32
    return %arg0, %c0_i32, %c0_i32_0 : i32, i32, i32
  }
  func.func @transform_1(%arg0: i32) -> (i32, i32) {
    %c0_i32 = arith.constant 0 : i32
    %c0_i32_0 = arith.constant 0 : i32
    %c0_i32_1 = arith.constant 0 : i32
    return %c0_i32, %c0_i32_0 : i32, i32
  }
  func.func @transform_2(%arg0: i32) -> (i32, i32) {
    %c0_i32 = arith.constant 0 : i32
    %c0_i32_0 = arith.constant 0 : i32
    %c0_i32_1 = arith.constant 0 : i32
    return %c0_i32, %c0_i32_0 : i32, i32
  }
  func.func @transform_3(%arg0: i32) -> (i32, i32) {
    %c0_i32 = arith.constant 0 : i32
    %c0_i32_0 = arith.constant 0 : i32
    return %arg0, %c0_i32 : i32, i32
  }
}

</mosaic_0001>

<llo_original>
// kernel: tpu_custom_call.1
$region0: #{tpu_custom_call.1}
  #allocation0 [shape = 'u32[]', space=smem, size = 0x4, offset = 0x4, fixed_abs, tag = 'smem constant byte address 0x4 - core index']
  #allocation1 [shape = 'u32[144,128]{1,0:T(1,128)}', space=vmem, size = 0x12000, scoped, tag = 'internal scratch']
  %s0 = inlined_call_operand.vmem [shape: bf16[32,3,60], index: 0, kind: input, shape index: {}]
  %s1 = inlined_call_operand.vmem [shape: bf16[60,320], index: 1, kind: input, shape index: {}]
  %s2 = inlined_call_operand.vmem [shape: f32[1,320], index: 2, kind: input, shape index: {}]
  %s3 = inlined_call_operand.hbm [shape: f32[32,320], index: 3, kind: output, shape index: {}]
  %s4 = sld [smem:[#allocation0]]
  $region45: #{tpu_custom_call.1} parent=0
    _
  %s6 = ssub.s32 1, %s4
  %s7 = scalar_select 0, %s6, %s4
  $region1: #{tpu_custom_call.1} parent=0
    #allocation2 [shape = 'u8[49152]{0}', space=vmem, size = 0xc000, scoped, tag = 'output window, operand 0']
    #allocation3 [shape = 's32[2]{0}', space=sflag, size = 0x8, scoped, tag = 'scoped memory for tpu_custom_call.1']
    %8 = vsyncpa [#allocation3], 0
    %s9 = scalar_lea.sflag [#allocation3], 1
    %10 = vsyncpa %s9, 0
    loop: start=0, step=1, limit=4
    $region2: #{tpu_custom_call.1} parent=1 // loop_pre_header
      _
    $region3: #{tpu_custom_call.1} parent=1 // loop_header
      %s12 = sphi 0, %s16
      %p13 = scmp.ge.s32.totalorder %s12, 4
      %s22 = sphi 0, %s24
      %s25 = sphi 0, %s22
      %s26 = sphi 0, %s25
      %s42 = sphi 0, %s26
      %s46 = sphi 0, %s46
      %s48 = sphi 0, %s46
      %s49 = sphi 0, %s48
      %s63 = sphi 0, %s49
      %s67 = sphi 0, %s67
      %s69 = sphi 0, %s67
      %s70 = sphi 0, %s69
      %s84 = sphi 0, %s70
      %s90 = sphi 0, %s92
      %s93 = sphi 0, %s90
      %s94 = sphi 0, %s93
      %s110 = sphi 0, %s94
    $region4: #{tpu_custom_call.1} parent=1 // loop_header_branch
      %15 = sbr.rel (%p13) target = $region8
    $region5: #{tpu_custom_call.1} parent=1 // loop_body
      %s17 = ssub.s32 %s12, 1
      %s18 = ssub.s32 %s12, 2
      %s19 = sadd.s32 %s12, 1
      %s20 = ssub.s32 %s12, %s19
      %p21 = scmp.eq.s32.totalorder %s20, 0
      %s23 = sadd.s32 %s22, 1
      %s24 = scalar_select %p21, %s22, %s23
      %p27 = pneg %p21
      %p28 = scmp.eq.s32.totalorder %s12, 1
      %p29 = por %p27, %p28
      %p30 = scmp.ne.s32.totalorder %s22, %s25
      %p31 = scmp.eq.s32.totalorder %s12, 0
      %p32 = por %p30, %p31
      %p33 = scmp.ne.s32.totalorder %s22, %s25
      %p34 = scmp.eq.s32.totalorder %s17, 1
      %p35 = por %p33, %p34
      %p36 = scmp.ne.s32.totalorder %s25, %s26
      %p37 = scmp.eq.s32.totalorder %s17, 0
      %p38 = por %p36, %p37
      %p39 = scmp.ne.s32.totalorder %s25, %s26
      %p40 = scmp.eq.s32.totalorder %s18, 1
      %p41 = por %p39, %p40
      %p43 = scmp.ne.s32.totalorder %s26, %s42
      %p44 = scmp.eq.s32.totalorder %s18, 0
      %p45 = por %p43, %p44
      %s47 = sadd.s32 %s46, 1
      %p50 = scmp.eq.s32.totalorder %s12, 1
      %p51 = scmp.ne.s32.totalorder %s46, %s48
      %p52 = scmp.eq.s32.totalorder %s12, 0
      %p53 = por %p51, %p52
      %p54 = scmp.ne.s32.totalorder %s46, %s48
      %p55 = scmp.eq.s32.totalorder %s17, 1
      %p56 = por %p54, %p55
      %p57 = scmp.ne.s32.totalorder %s48, %s49
      %p58 = scmp.eq.s32.totalorder %s17, 0
      %p59 = por %p57, %p58
      %p60 = scmp.ne.s32.totalorder %s48, %s49
      %p61 = scmp.eq.s32.totalorder %s18, 1
      %p62 = por %p60, %p61
      %p64 = scmp.ne.s32.totalorder %s49, %s63
      %p65 = scmp.eq.s32.totalorder %s18, 0
      %p66 = por %p64, %p65
      %s68 = sadd.s32 %s67, 1
      %p71 = scmp.eq.s32.totalorder %s12, 1
      %p72 = scmp.ne.s32.totalorder %s67, %s69
      %p73 = scmp.eq.s32.totalorder %s12, 0
      %p74 = por %p72, %p73
      %p75 = scmp.ne.s32.totalorder %s67, %s69
      %p76 = scmp.eq.s32.totalorder %s17, 1
      %p77 = por %p75, %p76
      %p78 = scmp.ne.s32.totalorder %s69, %s70
      %p79 = scmp.eq.s32.totalorder %s17, 0
      %p80 = por %p78, %p79
      %p81 = scmp.ne.s32.totalorder %s69, %s70
      %p82 = scmp.eq.s32.totalorder %s18, 1
      %p83 = por %p81, %p82
      %p85 = scmp.ne.s32.totalorder %s70, %s84
      %p86 = scmp.eq.s32.totalorder %s18, 0
      %p87 = por %p85, %p86
      %s88 = ssub.s32 %s12, %s19
      %p89 = scmp.eq.s32.totalorder %s88, 0
      %s91 = sadd.s32 %s90, 1
      %s92 = scalar_select %p89, %s90, %s91
      %p95 = pneg %p89
      %p96 = scmp.eq.s32.totalorder %s12, 1
      %p97 = por %p95, %p96
      %p98 = scmp.ne.s32.totalorder %s90, %s93
      %p99 = scmp.eq.s32.totalorder %s12, 0
      %p100 = por %p98, %p99
      %p101 = scmp.ne.s32.totalorder %s90, %s93
      %p102 = scmp.eq.s32.totalorder %s17, 1
      %p103 = por %p101, %p102
      %p104 = scmp.ne.s32.totalorder %s93, %s94
      %p105 = scmp.eq.s32.totalorder %s17, 0
      %p106 = por %p104, %p105
      %p107 = scmp.ne.s32.totalorder %s93, %s94
      %p108 = scmp.eq.s32.totalorder %s18, 1
      %p109 = por %p107, %p108
      %p111 = scmp.ne.s32.totalorder %s94, %s110
      %p112 = scmp.eq.s32.totalorder %s18, 0
      %p113 = por %p111, %p112
      %p114 = scmp.le.s32.totalorder 1, %s12
      %p115 = scmp.lt.s32.totalorder %s12, 3
      %p116 = pnand %p114, %p115
      %p117 = pneg %p116
      // Predicated region
      $region9: #{tpu_custom_call.1} parent=5 // pred_check
        _
      $region10: #{tpu_custom_call.1} parent=5 // pred_check_branch
        %119 = sbr.rel (%p116) target = $region12
      $region11: #{tpu_custom_call.1} parent=5 // pred_region
        %s120 = ssub.s32 %s12, 1
        // Predicated region
        $region13: #{tpu_custom_call.1} parent=11 // pred_check
          %p121 = pneg %p59
        $region14: #{tpu_custom_call.1} parent=11 // pred_check_branch
          %123 = sbr.rel (%p121) target = $region16
        $region15: #{tpu_custom_call.1} parent=11 // pred_region
          _
        $region16: #{tpu_custom_call.1} parent=11 // pred_fallthru
          _
        // Predicated region
        $region17: #{tpu_custom_call.1} parent=11 // pred_check
          %p124 = pneg %p80
        $region18: #{tpu_custom_call.1} parent=11 // pred_check_branch
          %126 = sbr.rel (%p124) target = $region20
        $region19: #{tpu_custom_call.1} parent=11 // pred_region
          _
        $region20: #{tpu_custom_call.1} parent=11 // pred_fallthru
          _
      $region12: #{tpu_custom_call.1} parent=5 // pred_fallthru
        _
      %p127 = scmp.lt.s32.totalorder %s12, 2
      // Predicated region
      $region21: #{tpu_custom_call.1} parent=5 // pred_check
        %p128 = pneg %p127
      $region22: #{tpu_custom_call.1} parent=5 // pred_check_branch
        %130 = sbr.rel (%p128) target = $region24
      $region23: #{tpu_custom_call.1} parent=5 // pred_region
        // Predicated region
        $region25: #{tpu_custom_call.1} parent=23 // pred_check
          %p131 = pneg %p32
        $region26: #{tpu_custom_call.1} parent=23 // pred_check_branch
          %133 = sbr.rel (%p131) target = $region28
        $region27: #{tpu_custom_call.1} parent=23 // pred_region
          %s134 = smul.u32 16, %s12
          %p135 = scmp.lt.s32.totalorder %s134, 31
          %s136 = scalar_select %p135, %s134, 31
          %s137 = smul.addr %s136, 2
          %s138 = scalar_lea.vmem %s0, %s137
          %s139 = smul.u32 16, %s12
        $region28: #{tpu_custom_call.1} parent=23 // pred_fallthru
          _
      $region24: #{tpu_custom_call.1} parent=5 // pred_fallthru
        _
      %p140 = scmp.le.s32.totalorder 1, %s12
      %p141 = scmp.lt.s32.totalorder %s12, 3
      %p142 = pnand %p140, %p141
      %p143 = pneg %p142
      // Predicated region
      $region29: #{tpu_custom_call.1} parent=5 // pred_check
        _
      $region30: #{tpu_custom_call.1} parent=5 // pred_check_branch
        %145 = sbr.rel (%p142) target = $region32
      $region31: #{tpu_custom_call.1} parent=5 // pred_region
        %s146 = ssub.s32 %s12, 1
        %s147 = smul.u32 16, %s17
        %p148 = scmp.lt.s32.totalorder %s147, 31
        %s149 = scalar_select %p148, %s147, 31
        %s150 = smul.addr %s149, 2
        %s151 = scalar_lea.vmem %s0, %s150
        %p152 = pneg %p38
        %p153 = pneg %p35
        %p154 = pneg %p59
        %p155 = pneg %p56
        %p156 = pneg %p80
        %p157 = pneg %p77
        %p158 = pneg %p106
        %p159 = pneg %p103
        %s160 = sand.u32 %s93, 1
        %s161 = scalar_lea.sflag [#allocation3], %s160
        %s162 = sand.u32 %s93, 1
        %s163 = smul.addr %s162, 48
        %s164 = scalar_lea.vmem [#allocation2], %s163
        %s165 = smul.u32 16, %s17
        %p166 = scmp.lt.s32.totalorder %s165, 31
        %s167 = scalar_select %p166, %s165, 31
        %s168 = smul.addr %s167, 2
        %s169 = scalar_lea.vmem %s0, %s168
        %s170 = smul.u32 16, %s17
        %s171 = smul.u32 2, %s17
        %v173 = vld [vmem:[%s1] sm:$0xff]
        %v174 = vld [vmem:[%s1 + $0x8] sm:$0xf]
        %v175 = vld [vmem:[%s1 + $0xc] sm:$0xff]
        %v176 = vld [vmem:[%s1 + $0x14] sm:$0xf]
        %v177 = vld [vmem:[%s1 + $0x18] sm:$0xff]
        %v178 = vld [vmem:[%s1 + $0x20] sm:$0xf]
        %v179 = vld [vmem:[%s1 + $0x24] sm:$0xff]
        %v180 = vld [vmem:[%s1 + $0x2c] sm:$0xf]
        %v181 = vld [vmem:[%s1 + $0x30] sm:$0xff]
        %v182 = vld [vmem:[%s1 + $0x38] sm:$0xf]
        %v183 = vld [vmem:[%s1 + $0x3c] sm:$0xff]
        %v184 = vld [vmem:[%s1 + $0x44] sm:$0xf]
        %v185 = vld [vmem:[%s1 + $0x48] sm:$0xff]
        %v186 = vld [vmem:[%s1 + $0x50] sm:$0xf]
        %v187 = vld [vmem:[%s1 + $0x54] sm:$0x33]
        %v188 = vld [vmem:[%s1 + $0x5c] sm:$0x3]
        %v189 = vld [vmem:[%s2] sm:$0x7]
        %v191 = vlaneseq
        %v192 = vshrl.u32 %v191, 7
        %v193 = vsub.s32 0, %v192
        %v194 = vrot.slane %v189, %v193
        %v195 = vlaneseq
        %v196 = vshrl.u32 %v195, 7
        %v197 = vsub.s32 1, %v196
        %v198 = vrot.slane %v189, %v197
        %v199 = vlaneseq
        %v200 = vshrl.u32 %v199, 7
        %v201 = vsub.s32 2, %v200
        %v202 = vrot.slane %v189, %v201
        %v206 = vld [vmem:[%s169] sm:$0x1]
        %v207 = vld [vmem:[%s169 + $0x2] sm:$0x1]
        %v208 = vld [vmem:[%s169 + $0x4] sm:$0x1]
        %v209 = vld [vmem:[%s169 + $0x6] sm:$0x1]
        %v210 = vld [vmem:[%s169 + $0x8] sm:$0x1]
        %v211 = vld [vmem:[%s169 + $0xa] sm:$0x1]
        %v212 = vld [vmem:[%s169 + $0xc] sm:$0x1]
        %v213 = vld [vmem:[%s169 + $0xe] sm:$0x1]
        %v214 = vld [vmem:[%s169 + $0x10] sm:$0x1]
        %v215 = vld [vmem:[%s169 + $0x12] sm:$0x1]
        %v216 = vld [vmem:[%s169 + $0x14] sm:$0x1]
        %v217 = vld [vmem:[%s169 + $0x16] sm:$0x1]
        %v218 = vld [vmem:[%s169 + $0x18] sm:$0x1]
        %v219 = vld [vmem:[%s169 + $0x1a] sm:$0x1]
        %v220 = vld [vmem:[%s169 + $0x1c] sm:$0x1]
        %v221 = vld [vmem:[%s169 + $0x1e] sm:$0x1]
        %v239 = vunpack.c.l.s4 1983009808
        %v240 = vunpack.c.0.s8 %v239
        %v241 = vlaneseq
        %v242 = vshrl.u32 %v241, 7
        %v243 = vsub.s32 %v240, %v242
        %v244 = vrot.slane %v206, %v243
        %v246 = vunpack.c.l.s4 1983009808
        %v247 = vunpack.c.0.s8 %v246
        %v248 = vlaneseq
        %v249 = vshrl.u32 %v248, 7
        %v250 = vsub.s32 %v247, %v249
        %v251 = vrot.slane %v207, %v250
        %v253 = vunpack.c.l.s4 1983009808
        %v254 = vunpack.c.0.s8 %v253
        %v255 = vlaneseq
        %v256 = vshrl.u32 %v255, 7
        %v257 = vsub.s32 %v254, %v256
        %v258 = vrot.slane %v208, %v257
        %v260 = vunpack.c.l.s4 1983009808
        %v261 = vunpack.c.0.s8 %v260
        %v262 = vlaneseq
        %v263 = vshrl.u32 %v262, 7
        %v264 = vsub.s32 %v261, %v263
        %v265 = vrot.slane %v209, %v264
        %v267 = vunpack.c.l.s4 1983009808
        %v268 = vunpack.c.0.s8 %v267
        %v269 = vlaneseq
        %v270 = vshrl.u32 %v269, 7
        %v271 = vsub.s32 %v268, %v270
        %v272 = vrot.slane %v210, %v271
        %v274 = vunpack.c.l.s4 1983009808
        %v275 = vunpack.c.0.s8 %v274
        %v276 = vlaneseq
        %v277 = vshrl.u32 %v276, 7
        %v278 = vsub.s32 %v275, %v277
        %v279 = vrot.slane %v211, %v278
        %v281 = vunpack.c.l.s4 1983009808
        %v282 = vunpack.c.0.s8 %v281
        %v283 = vlaneseq
        %v284 = vshrl.u32 %v283, 7
        %v285 = vsub.s32 %v282, %v284
        %v286 = vrot.slane %v212, %v285
        %v288 = vunpack.c.l.s4 1983009808
        %v289 = vunpack.c.0.s8 %v288
        %v290 = vlaneseq
        %v291 = vshrl.u32 %v290, 7
        %v292 = vsub.s32 %v289, %v291
        %v293 = vrot.slane %v213, %v292
        %v295 = vunpack.c.l.s4 1983009808
        %v296 = vunpack.c.0.s8 %v295
        %v297 = vlaneseq
        %v298 = vshrl.u32 %v297, 7
        %v299 = vsub.s32 %v296, %v298
        %v300 = vrot.slane %v214, %v299
        %v302 = vunpack.c.l.s4 1983009808
        %v303 = vunpack.c.0.s8 %v302
        %v304 = vlaneseq
        %v305 = vshrl.u32 %v304, 7
        %v306 = vsub.s32 %v303, %v305
        %v307 = vrot.slane %v215, %v306
        %v309 = vunpack.c.l.s4 1983009808
        %v310 = vunpack.c.0.s8 %v309
        %v311 = vlaneseq
        %v312 = vshrl.u32 %v311, 7
        %v313 = vsub.s32 %v310, %v312
        %v314 = vrot.slane %v216, %v313
        %v316 = vunpack.c.l.s4 1983009808
        %v317 = vunpack.c.0.s8 %v316
        %v318 = vlaneseq
        %v319 = vshrl.u32 %v318, 7
        %v320 = vsub.s32 %v317, %v319
        %v321 = vrot.slane %v217, %v320
        %v323 = vunpack.c.l.s4 1983009808
        %v324 = vunpack.c.0.s8 %v323
        %v325 = vlaneseq
        %v326 = vshrl.u32 %v325, 7
        %v327 = vsub.s32 %v324, %v326
        %v328 = vrot.slane %v218, %v327
        %v330 = vunpack.c.l.s4 1983009808
        %v331 = vunpack.c.0.s8 %v330
        %v332 = vlaneseq
        %v333 = vshrl.u32 %v332, 7
        %v334 = vsub.s32 %v331, %v333
        %v335 = vrot.slane %v219, %v334
        %v337 = vunpack.c.l.s4 1983009808
        %v338 = vunpack.c.0.s8 %v337
        %v339 = vlaneseq
        %v340 = vshrl.u32 %v339, 7
        %v341 = vsub.s32 %v338, %v340
        %v342 = vrot.slane %v220, %v341
        %v344 = vunpack.c.l.s4 1983009808
        %v345 = vunpack.c.0.s8 %v344
        %v346 = vlaneseq
        %v347 = vshrl.u32 %v346, 7
        %v348 = vsub.s32 %v345, %v347
        %v349 = vrot.slane %v221, %v348
        %v350 = vunpack.c.l.b16 %v244
        %v351 = vunpack.c.l.b16 %v251
        %v352 = vunpack.c.l.b16 %v258
        %v353 = vunpack.c.l.b16 %v265
        %v354 = vunpack.c.l.b16 %v272
        %v355 = vunpack.c.l.b16 %v279
        %v356 = vunpack.c.l.b16 %v286
        %v357 = vunpack.c.l.b16 %v293
        %v358 = vunpack.c.l.b16 %v300
        %v359 = vunpack.c.l.b16 %v307
        %v360 = vunpack.c.l.b16 %v314
        %v361 = vunpack.c.l.b16 %v321
        %v362 = vunpack.c.l.b16 %v328
        %v363 = vunpack.c.l.b16 %v335
        %v364 = vunpack.c.l.b16 %v342
        %v365 = vunpack.c.l.b16 %v349
        %v366 = vrot.slane %v351, 7
        %vm367 = vcmask 1041409
        %v368 = vsel %vm367, %v366, %v350
        %v369 = vrot.slane %v352, 6
        %vm370 = vcmask 1042434
        %v371 = vsel %vm370, %v369, %v368
        %v372 = vrot.slane %v353, 5
        %vm373 = vcmask 1043459
        %v374 = vsel %vm373, %v372, %v371
        %v375 = vrot.slane %v354, 4
        %vm376 = vcmask 1044484
        %v377 = vsel %vm376, %v375, %v374
        %v378 = vrot.slane %v355, 3
        %vm379 = vcmask 1045509
        %v380 = vsel %vm379, %v378, %v377
        %v381 = vrot.slane %v356, 2
        %vm382 = vcmask 1046534
        %v383 = vsel %vm382, %v381, %v380
        %v384 = vrot.slane %v357, 1
        %vm385 = vcmask 1047559
        %v386 = vsel %vm385, %v384, %v383
        %v387 = vrot.slane %v359, 7
        %v388 = vsel %vm367, %v387, %v358
        %v389 = vrot.slane %v360, 6
        %v390 = vsel %vm370, %v389, %v388
        %v391 = vrot.slane %v361, 5
        %v392 = vsel %vm373, %v391, %v390
        %v393 = vrot.slane %v362, 4
        %v394 = vsel %vm376, %v393, %v392
        %v395 = vrot.slane %v363, 3
        %v396 = vsel %vm379, %v395, %v394
        %v397 = vrot.slane %v364, 2
        %v398 = vsel %vm382, %v397, %v396
        %v399 = vrot.slane %v365, 1
        %v400 = vsel %vm385, %v399, %v398
        %v401 = vpack.c.b16 %v400, %v386
        %v418 = vunpack.c.l.b16 %v173
        %v419 = vunpack.c.h.b16 %v173
        %v420 = vunpack.c.l.b16 %v174
        %v421 = vunpack.c.l.b16 %v175
        %v422 = vunpack.c.h.b16 %v175
        %v423 = vunpack.c.l.b16 %v176
        %v424 = vunpack.c.l.b16 %v177
        %v425 = vunpack.c.h.b16 %v177
        %v426 = vunpack.c.l.b16 %v178
        %v427 = vunpack.c.l.b16 %v179
        %v428 = vunpack.c.h.b16 %v179
        %v429 = vunpack.c.l.b16 %v180
        %v430 = vunpack.c.l.b16 %v181
        %v431 = vunpack.c.h.b16 %v181
        %v432 = vunpack.c.l.b16 %v182
        %v433 = vunpack.c.l.b16 %v183
        %v434 = vunpack.c.h.b16 %v183
        %v435 = vunpack.c.l.b16 %v184
        %v436 = vunpack.c.l.b16 %v185
        %v437 = vunpack.c.h.b16 %v185
        %v438 = vunpack.c.l.b16 %v186
        %v439 = vunpack.c.l.b16 %v187
        %v440 = vunpack.c.h.b16 %v187
        %v441 = vunpack.c.l.b16 %v188
        %v442 = vpack.c.b16 %v421, %v418
        %v443 = vpack.c.b16 %v422, %v419
        %v444 = vpack.c.b16 %v423, %v420
        %v445 = vpack.c.b16 %v427, %v424
        %v446 = vpack.c.b16 %v428, %v425
        %v447 = vpack.c.b16 %v429, %v426
        %v448 = vpack.c.b16 %v433, %v430
        %v449 = vpack.c.b16 %v434, %v431
        %v450 = vpack.c.b16 %v435, %v432
        %v451 = vpack.c.b16 %v439, %v436
        %v452 = vpack.c.b16 %v440, %v437
        %v453 = vpack.c.b16 %v441, %v438
        %vm463 = vcmask 490496
        %v465 = vsel %vm463, %v401, 0
        %vm467 = vcmask 1045504
        %v469 = vsel %vm467, %v451, 0
        %v472 = vsel %vm467, %v452, 0
        %v475 = vsel %vm467, %v453, 0
        %477 = vmatprep.subr.bf16.mxu0 %v443
        %478 = vmatpush1.bf16.msra.mxu0 %v442
        %479 = vmatprep.subr.bf16.mxu0 %v446
        %480 = vmatpush1.bf16.msra.mxu0 %v445
        %481 = vmatprep.subr.bf16.mxu0 %v449
        %482 = vmatpush1.bf16.msra.mxu0 %v448
        %483 = vmatprep.subr.bf16.mxu0 %v472
        %484 = vmatpush1.bf16.msra.mxu0 %v469
        %485 = vmatprep.subr.bf16.mxu0 0
        %486 = vmatpush1.bf16.msra.mxu0 0
        %487 = vmatprep.subr.bf16.mxu0 0
        %488 = vmatpush1.bf16.msra.mxu0 0
        %489 = vmatprep.subr.bf16.mxu0 0
        %490 = vmatpush1.bf16.msra.mxu0 0
        %491 = vmatprep.subr.bf16.mxu0 0
        %492 = vmatpush1.bf16.msra.mxu0 0
        %493 = vmatprep.subr.bf16.mxu0 0
        %494 = vmatpush1.bf16.msra.mxu0 0
        %495 = vmatprep.subr.bf16.mxu0 0
        %496 = vmatpush1.bf16.msra.mxu0 0
        %497 = vmatprep.subr.bf16.mxu0 0
        %498 = vmatpush1.bf16.msra.mxu0 0
        %499 = vmatprep.subr.bf16.mxu0 0
        %500 = vmatpush1.bf16.msra.mxu0 0
        %501 = vmatprep.subr.bf16.mxu0 0
        %502 = vmatpush1.bf16.msra.mxu0 0
        %503 = vmatprep.subr.bf16.mxu0 0
        %504 = vmatpush1.bf16.msra.mxu0 0
        %505 = vmatprep.subr.bf16.mxu0 0
        %506 = vmatpush1.bf16.msra.mxu0 0
        %507 = vmatprep.subr.bf16.mxu0 0
        %508 = vmatpush1.bf16.msra.mxu0 0
        %509 = vmatprep.mubr.bf16.mxu0 0
        %510 = vmatmul.mubr.bf16.gmra.mrb[0].mxu0 %v465
        %v511 = vpop.f32.mrb[0].mxu0
        %v512 = vadd.f32 %v194, %v511
        %v513 = vpop.f32.mrb[0].mxu0
        %v514 = vadd.f32 %v198, %v513
        %v515 = vpop.f32.mrb[0].mxu0
        %v516 = vadd.f32 %v194, %v515
        %v517 = vpop.f32.mrb[0].mxu0
        %v518 = vadd.f32 %v198, %v517
        %519 = vdwg.mxu0
        %520 = vmatprep.subr.bf16.mxu0 0
        %521 = vmatpush1.bf16.msra.mxu0 %v444
        %522 = vmatprep.subr.bf16.mxu0 0
        %523 = vmatpush1.bf16.msra.mxu0 %v447
        %524 = vmatprep.subr.bf16.mxu0 0
        %525 = vmatpush1.bf16.msra.mxu0 %v450
        %526 = vmatprep.subr.bf16.mxu0 0
        %527 = vmatpush1.bf16.msra.mxu0 %v475
        %528 = vmatprep.subr.bf16.mxu0 0
        %529 = vmatpush1.bf16.msra.mxu0 0
        %530 = vmatprep.subr.bf16.mxu0 0
        %531 = vmatpush1.bf16.msra.mxu0 0
        %532 = vmatprep.subr.bf16.mxu0 0
        %533 = vmatpush1.bf16.msra.mxu0 0
        %534 = vmatprep.subr.bf16.mxu0 0
        %535 = vmatpush1.bf16.msra.mxu0 0
        %536 = vmatprep.subr.bf16.mxu0 0
        %537 = vmatpush1.bf16.msra.mxu0 0
        %538 = vmatprep.subr.bf16.mxu0 0
        %539 = vmatpush1.bf16.msra.mxu0 0
        %540 = vmatprep.subr.bf16.mxu0 0
        %541 = vmatpush1.bf16.msra.mxu0 0
        %542 = vmatprep.subr.bf16.mxu0 0
        %543 = vmatpush1.bf16.msra.mxu0 0
        %544 = vmatprep.subr.bf16.mxu0 0
        %545 = vmatpush1.bf16.msra.mxu0 0
        %546 = vmatprep.subr.bf16.mxu0 0
        %547 = vmatpush1.bf16.msra.mxu0 0
        %548 = vmatprep.subr.bf16.mxu0 0
        %549 = vmatpush1.bf16.msra.mxu0 0
        %550 = vmatprep.subr.bf16.mxu0 0
        %551 = vmatpush1.bf16.msra.mxu0 0
        %552 = vmatprep.mubr.bf16.mxu0 0
        %553 = vmatmul.mubr.bf16.gmra.mrb[0].mxu0 %v465
        %v554 = vpop.f32.mrb[0].mxu0
        %v555 = vadd.f32 %v202, %v554
        %v556 = vpop.f32.mrb[0].mxu0
        %v557 = vpop.f32.mrb[0].mxu0
        %v558 = vadd.f32 %v202, %v557
        %v559 = vpop.f32.mrb[0].mxu0
        %560 = vdwg.mxu0
        %v561 = vxor.u32 %v512, 2147483648
        %v562 = vxor.u32 %v514, 2147483648
        %v563 = vxor.u32 %v555, 2147483648
        %v564 = vxor.u32 %v516, 2147483648
        %v565 = vxor.u32 %v518, 2147483648
        %v566 = vxor.u32 %v558, 2147483648
        %v567 = vmul.f32 %v561, 1.442695
        %v568 = vpow.pop %v567
        %v569 = vmul.f32 %v562, 1.442695
        %v570 = vpow.pop %v569
        %v571 = vmul.f32 %v563, 1.442695
        %v572 = vpow.pop %v571
        %v573 = vmul.f32 %v564, 1.442695
        %v574 = vpow.pop %v573
        %v575 = vmul.f32 %v565, 1.442695
        %v576 = vpow.pop %v575
        %v577 = vmul.f32 %v566, 1.442695
        %v578 = vpow.pop %v577
        %v579 = vadd.f32 %v568, 1.0
        %v580 = vadd.f32 %v570, 1.0
        %v581 = vadd.f32 %v572, 1.0
        %v582 = vadd.f32 %v574, 1.0
        %v583 = vadd.f32 %v576, 1.0
        %v584 = vadd.f32 %v578, 1.0
        %v585 = vrcp.pop %v579
        %v586 = vmul.f32 1.0, %v585
        %v587 = vrcp.pop %v580
        %v588 = vmul.f32 1.0, %v587
        %v589 = vrcp.pop %v581
        %v590 = vmul.f32 1.0, %v589
        %v591 = vrcp.pop %v582
        %v592 = vmul.f32 1.0, %v591
        %v593 = vrcp.pop %v583
        %v594 = vmul.f32 1.0, %v593
        %v595 = vrcp.pop %v584
        %v596 = vmul.f32 1.0, %v595
        %v597 = vmul.f32 %v512, %v586
        %v598 = vmul.f32 %v514, %v588
        %v599 = vmul.f32 %v555, %v590
        %v600 = vmul.f32 %v516, %v592
        %v601 = vmul.f32 %v518, %v594
        %v602 = vmul.f32 %v558, %v596
        %v603 = vld [vmem:[%s169] sm:$0x1]
        %v604 = vld [vmem:[%s169 + $0x2] sm:$0x1]
        %v605 = vld [vmem:[%s169 + $0x4] sm:$0x1]
        %v606 = vld [vmem:[%s169 + $0x6] sm:$0x1]
        %v607 = vld [vmem:[%s169 + $0x8] sm:$0x1]
        %v608 = vld [vmem:[%s169 + $0xa] sm:$0x1]
        %v609 = vld [vmem:[%s169 + $0xc] sm:$0x1]
        %v610 = vld [vmem:[%s169 + $0xe] sm:$0x1]
        %v611 = vld [vmem:[%s169 + $0x10] sm:$0x1]
        %v612 = vld [vmem:[%s169 + $0x12] sm:$0x1]
        %v613 = vld [vmem:[%s169 + $0x14] sm:$0x1]
        %v614 = vld [vmem:[%s169 + $0x16] sm:$0x1]
        %v615 = vld [vmem:[%s169 + $0x18] sm:$0x1]
        %v616 = vld [vmem:[%s169 + $0x1a] sm:$0x1]
        %v617 = vld [vmem:[%s169 + $0x1c] sm:$0x1]
        %v618 = vld [vmem:[%s169 + $0x1e] sm:$0x1]
        %v636 = vunpack.c.l.s4 1983009808
        %v637 = vunpack.c.0.s8 %v636
        %v638 = vlaneseq
        %v639 = vshrl.u32 %v638, 7
        %v640 = vsub.s32 %v637, %v639
        %v641 = vrot.slane %v603, %v640
        %v643 = vunpack.c.l.s4 1983009808
        %v644 = vunpack.c.0.s8 %v643
        %v645 = vlaneseq
        %v646 = vshrl.u32 %v645, 7
        %v647 = vsub.s32 %v644, %v646
        %v648 = vrot.slane %v604, %v647
        %v650 = vunpack.c.l.s4 1983009808
        %v651 = vunpack.c.0.s8 %v650
        %v652 = vlaneseq
        %v653 = vshrl.u32 %v652, 7
        %v654 = vsub.s32 %v651, %v653
        %v655 = vrot.slane %v605, %v654
        %v657 = vunpack.c.l.s4 1983009808
        %v658 = vunpack.c.0.s8 %v657
        %v659 = vlaneseq
        %v660 = vshrl.u32 %v659, 7
        %v661 = vsub.s32 %v658, %v660
        %v662 = vrot.slane %v606, %v661
        %v664 = vunpack.c.l.s4 1983009808
        %v665 = vunpack.c.0.s8 %v664
        %v666 = vlaneseq
        %v667 = vshrl.u32 %v666, 7
        %v668 = vsub.s32 %v665, %v667
        %v669 = vrot.slane %v607, %v668
        %v671 = vunpack.c.l.s4 1983009808
        %v672 = vunpack.c.0.s8 %v671
        %v673 = vlaneseq
        %v674 = vshrl.u32 %v673, 7
        %v675 = vsub.s32 %v672, %v674
        %v676 = vrot.slane %v608, %v675
        %v678 = vunpack.c.l.s4 1983009808
        %v679 = vunpack.c.0.s8 %v678
        %v680 = vlaneseq
        %v681 = vshrl.u32 %v680, 7
        %v682 = vsub.s32 %v679, %v681
        %v683 = vrot.slane %v609, %v682
        %v685 = vunpack.c.l.s4 1983009808
        %v686 = vunpack.c.0.s8 %v685
        %v687 = vlaneseq
        %v688 = vshrl.u32 %v687, 7
        %v689 = vsub.s32 %v686, %v688
        %v690 = vrot.slane %v610, %v689
        %v692 = vunpack.c.l.s4 1983009808
        %v693 = vunpack.c.0.s8 %v692
        %v694 = vlaneseq
        %v695 = vshrl.u32 %v694, 7
        %v696 = vsub.s32 %v693, %v695
        %v697 = vrot.slane %v611, %v696
        %v699 = vunpack.c.l.s4 1983009808
        %v700 = vunpack.c.0.s8 %v699
        %v701 = vlaneseq
        %v702 = vshrl.u32 %v701, 7
        %v703 = vsub.s32 %v700, %v702
        %v704 = vrot.slane %v612, %v703
        %v706 = vunpack.c.l.s4 1983009808
        %v707 = vunpack.c.0.s8 %v706
        %v708 = vlaneseq
        %v709 = vshrl.u32 %v708, 7
        %v710 = vsub.s32 %v707, %v709
        %v711 = vrot.slane %v613, %v710
        %v713 = vunpack.c.l.s4 1983009808
        %v714 = vunpack.c.0.s8 %v713
        %v715 = vlaneseq
        %v716 = vshrl.u32 %v715, 7
        %v717 = vsub.s32 %v714, %v716
        %v718 = vrot.slane %v614, %v717
        %v720 = vunpack.c.l.s4 1983009808
        %v721 = vunpack.c.0.s8 %v720
        %v722 = vlaneseq
        %v723 = vshrl.u32 %v722, 7
        %v724 = vsub.s32 %v721, %v723
        %v725 = vrot.slane %v615, %v724
        %v727 = vunpack.c.l.s4 1983009808
        %v728 = vunpack.c.0.s8 %v727
        %v729 = vlaneseq
        %v730 = vshrl.u32 %v729, 7
        %v731 = vsub.s32 %v728, %v730
        %v732 = vrot.slane %v616, %v731
        %v734 = vunpack.c.l.s4 1983009808
        %v735 = vunpack.c.0.s8 %v734
        %v736 = vlaneseq
        %v737 = vshrl.u32 %v736, 7
        %v738 = vsub.s32 %v735, %v737
        %v739 = vrot.slane %v617, %v738
        %v741 = vunpack.c.l.s4 1983009808
        %v742 = vunpack.c.0.s8 %v741
        %v743 = vlaneseq
        %v744 = vshrl.u32 %v743, 7
        %v745 = vsub.s32 %v742, %v744
        %v746 = vrot.slane %v618, %v745
        %v747 = vunpack.c.l.b16 %v641
        %v748 = vunpack.c.l.b16 %v648
        %v749 = vunpack.c.l.b16 %v655
        %v750 = vunpack.c.l.b16 %v662
        %v751 = vunpack.c.l.b16 %v669
        %v752 = vunpack.c.l.b16 %v676
        %v753 = vunpack.c.l.b16 %v683
        %v754 = vunpack.c.l.b16 %v690
        %v755 = vunpack.c.l.b16 %v697
        %v756 = vunpack.c.l.b16 %v704
        %v757 = vunpack.c.l.b16 %v711
        %v758 = vunpack.c.l.b16 %v718
        %v759 = vunpack.c.l.b16 %v725
        %v760 = vunpack.c.l.b16 %v732
        %v761 = vunpack.c.l.b16 %v739
        %v762 = vunpack.c.l.b16 %v746
        %v763 = vrot.slane %v747, 1
        %v764 = vsel %vm367, %v748, %v763
        %v765 = vrot.slane %v749, 7
        %v766 = vsel %vm370, %v765, %v764
        %v767 = vrot.slane %v750, 6
        %v768 = vsel %vm373, %v767, %v766
        %v769 = vrot.slane %v751, 5
        %v770 = vsel %vm376, %v769, %v768
        %v771 = vrot.slane %v752, 4
        %v772 = vsel %vm379, %v771, %v770
        %v773 = vrot.slane %v753, 3
        %v774 = vsel %vm382, %v773, %v772
        %v775 = vrot.slane %v754, 2
        %v776 = vsel %vm385, %v775, %v774
        %v777 = vrot.slane %v755, 1
        %v778 = vsel %vm367, %v756, %v777
        %v779 = vrot.slane %v757, 7
        %v780 = vsel %vm370, %v779, %v778
        %v781 = vrot.slane %v758, 6
        %v782 = vsel %vm373, %v781, %v780
        %v783 = vrot.slane %v759, 5
        %v784 = vsel %vm376, %v783, %v782
        %v785 = vrot.slane %v760, 4
        %v786 = vsel %vm379, %v785, %v784
        %v787 = vrot.slane %v761, 3
        %v788 = vsel %vm382, %v787, %v786
        %v789 = vrot.slane %v762, 2
        %v790 = vsel %vm385, %v789, %v788
        %v791 = vpack.c.b16 %v790, %v776
        %v793 = vsel %vm463, %v791, 0
        %795 = vmatprep.subr.bf16.mxu0 %v443
        %796 = vmatpush1.bf16.msra.mxu0 %v442
        %797 = vmatprep.subr.bf16.mxu0 %v446
        %798 = vmatpush1.bf16.msra.mxu0 %v445
        %799 = vmatprep.subr.bf16.mxu0 %v449
        %800 = vmatpush1.bf16.msra.mxu0 %v448
        %801 = vmatprep.subr.bf16.mxu0 %v472
        %802 = vmatpush1.bf16.msra.mxu0 %v469
        %803 = vmatprep.subr.bf16.mxu0 0
        %804 = vmatpush1.bf16.msra.mxu0 0
        %805 = vmatprep.subr.bf16.mxu0 0
        %806 = vmatpush1.bf16.msra.mxu0 0
        %807 = vmatprep.subr.bf16.mxu0 0
        %808 = vmatpush1.bf16.msra.mxu0 0
        %809 = vmatprep.subr.bf16.mxu0 0
        %810 = vmatpush1.bf16.msra.mxu0 0
        %811 = vmatprep.subr.bf16.mxu0 0
        %812 = vmatpush1.bf16.msra.mxu0 0
        %813 = vmatprep.subr.bf16.mxu0 0
        %814 = vmatpush1.bf16.msra.mxu0 0
        %815 = vmatprep.subr.bf16.mxu0 0
        %816 = vmatpush1.bf16.msra.mxu0 0
        %817 = vmatprep.subr.bf16.mxu0 0
        %818 = vmatpush1.bf16.msra.mxu0 0
        %819 = vmatprep.subr.bf16.mxu0 0
        %820 = vmatpush1.bf16.msra.mxu0 0
        %821 = vmatprep.subr.bf16.mxu0 0
        %822 = vmatpush1.bf16.msra.mxu0 0
        %823 = vmatprep.subr.bf16.mxu0 0
        %824 = vmatpush1.bf16.msra.mxu0 0
        %825 = vmatprep.subr.bf16.mxu0 0
        %826 = vmatpush1.bf16.msra.mxu0 0
        %827 = vmatprep.mubr.bf16.mxu0 0
        %828 = vmatmul.mubr.bf16.gmra.mrb[0].mxu0 %v793
        %v829 = vpop.f32.mrb[0].mxu0
        %v830 = vadd.f32 %v194, %v829
        %v831 = vpop.f32.mrb[0].mxu0
        %v832 = vadd.f32 %v198, %v831
        %v833 = vpop.f32.mrb[0].mxu0
        %v834 = vadd.f32 %v194, %v833
        %v835 = vpop.f32.mrb[0].mxu0
        %v836 = vadd.f32 %v198, %v835
        %837 = vdwg.mxu0
        %838 = vmatprep.subr.bf16.mxu0 0
        %839 = vmatpush1.bf16.msra.mxu0 %v444
        %840 = vmatprep.subr.bf16.mxu0 0
        %841 = vmatpush1.bf16.msra.mxu0 %v447
        %842 = vmatprep.subr.bf16.mxu0 0
        %843 = vmatpush1.bf16.msra.mxu0 %v450
        %844 = vmatprep.subr.bf16.mxu0 0
        %845 = vmatpush1.bf16.msra.mxu0 %v475
        %846 = vmatprep.subr.bf16.mxu0 0
        %847 = vmatpush1.bf16.msra.mxu0 0
        %848 = vmatprep.subr.bf16.mxu0 0
        %849 = vmatpush1.bf16.msra.mxu0 0
        %850 = vmatprep.subr.bf16.mxu0 0
        %851 = vmatpush1.bf16.msra.mxu0 0
        %852 = vmatprep.subr.bf16.mxu0 0
        %853 = vmatpush1.bf16.msra.mxu0 0
        %854 = vmatprep.subr.bf16.mxu0 0
        %855 = vmatpush1.bf16.msra.mxu0 0
        %856 = vmatprep.subr.bf16.mxu0 0
        %857 = vmatpush1.bf16.msra.mxu0 0
        %858 = vmatprep.subr.bf16.mxu0 0
        %859 = vmatpush1.bf16.msra.mxu0 0
        %860 = vmatprep.subr.bf16.mxu0 0
        %861 = vmatpush1.bf16.msra.mxu0 0
        %862 = vmatprep.subr.bf16.mxu0 0
        %863 = vmatpush1.bf16.msra.mxu0 0
        %864 = vmatprep.subr.bf16.mxu0 0
        %865 = vmatpush1.bf16.msra.mxu0 0
        %866 = vmatprep.subr.bf16.mxu0 0
        %867 = vmatpush1.bf16.msra.mxu0 0
        %868 = vmatprep.subr.bf16.mxu0 0
        %869 = vmatpush1.bf16.msra.mxu0 0
        %870 = vmatprep.mubr.bf16.mxu0 0
        %871 = vmatmul.mubr.bf16.gmra.mrb[0].mxu0 %v793
        %v872 = vpop.f32.mrb[0].mxu0
        %v873 = vadd.f32 %v202, %v872
        %v874 = vpop.f32.mrb[0].mxu0
        %v875 = vpop.f32.mrb[0].mxu0
        %v876 = vadd.f32 %v202, %v875
        %v877 = vpop.f32.mrb[0].mxu0
        %878 = vdwg.mxu0
        %v879 = vxor.u32 %v830, 2147483648
        %v880 = vxor.u32 %v832, 2147483648
        %v881 = vxor.u32 %v873, 2147483648
        %v882 = vxor.u32 %v834, 2147483648
        %v883 = vxor.u32 %v836, 2147483648
        %v884 = vxor.u32 %v876, 2147483648
        %v885 = vmul.f32 %v879, 1.442695
        %v886 = vpow.pop %v885
        %v887 = vmul.f32 %v880, 1.442695
        %v888 = vpow.pop %v887
        %v889 = vmul.f32 %v881, 1.442695
        %v890 = vpow.pop %v889
        %v891 = vmul.f32 %v882, 1.442695
        %v892 = vpow.pop %v891
        %v893 = vmul.f32 %v883, 1.442695
        %v894 = vpow.pop %v893
        %v895 = vmul.f32 %v884, 1.442695
        %v896 = vpow.pop %v895
        %v897 = vadd.f32 %v886, 1.0
        %v898 = vadd.f32 %v888, 1.0
        %v899 = vadd.f32 %v890, 1.0
        %v900 = vadd.f32 %v892, 1.0
        %v901 = vadd.f32 %v894, 1.0
        %v902 = vadd.f32 %v896, 1.0
        %v903 = vrcp.pop %v897
        %v904 = vmul.f32 1.0, %v903
        %v905 = vrcp.pop %v898
        %v906 = vmul.f32 1.0, %v905
        %v907 = vrcp.pop %v899
        %v908 = vmul.f32 1.0, %v907
        %v909 = vrcp.pop %v900
        %v910 = vmul.f32 1.0, %v909
        %v911 = vrcp.pop %v901
        %v912 = vmul.f32 1.0, %v911
        %v913 = vrcp.pop %v902
        %v914 = vmul.f32 1.0, %v913
        %v915 = vmul.f32 %v830, %v904
        %v916 = vmul.f32 %v832, %v906
        %v917 = vmul.f32 %v873, %v908
        %v918 = vmul.f32 %v834, %v910
        %v919 = vmul.f32 %v836, %v912
        %v920 = vmul.f32 %v876, %v914
        %v921 = vmax.f32 %v597, %v915
        %v922 = vmax.f32 %v598, %v916
        %v923 = vmax.f32 %v599, %v917
        %v924 = vmax.f32 %v600, %v918
        %v925 = vmax.f32 %v601, %v919
        %v926 = vmax.f32 %v602, %v920
        %v927 = vld [vmem:[%s169] sm:$0x2]
        %v928 = vld [vmem:[%s169 + $0x2] sm:$0x2]
        %v929 = vld [vmem:[%s169 + $0x4] sm:$0x2]
        %v930 = vld [vmem:[%s169 + $0x6] sm:$0x2]
        %v931 = vld [vmem:[%s169 + $0x8] sm:$0x2]
        %v932 = vld [vmem:[%s169 + $0xa] sm:$0x2]
        %v933 = vld [vmem:[%s169 + $0xc] sm:$0x2]
        %v934 = vld [vmem:[%s169 + $0xe] sm:$0x2]
        %v935 = vld [vmem:[%s169 + $0x10] sm:$0x2]
        %v936 = vld [vmem:[%s169 + $0x12] sm:$0x2]
        %v937 = vld [vmem:[%s169 + $0x14] sm:$0x2]
        %v938 = vld [vmem:[%s169 + $0x16] sm:$0x2]
        %v939 = vld [vmem:[%s169 + $0x18] sm:$0x2]
        %v940 = vld [vmem:[%s169 + $0x1a] sm:$0x2]
        %v941 = vld [vmem:[%s169 + $0x1c] sm:$0x2]
        %v942 = vld [vmem:[%s169 + $0x1e] sm:$0x2]
        %v960 = vunpack.c.l.s4 1983009808
        %v961 = vunpack.c.0.s8 %v960
        %v962 = vlaneseq
        %v963 = vshrl.u32 %v962, 7
        %v964 = vsub.s32 %v961, %v963
        %v965 = vrot.slane %v927, %v964
        %v967 = vunpack.c.l.s4 1983009808
        %v968 = vunpack.c.0.s8 %v967
        %v969 = vlaneseq
        %v970 = vshrl.u32 %v969, 7
        %v971 = vsub.s32 %v968, %v970
        %v972 = vrot.slane %v928, %v971
        %v974 = vunpack.c.l.s4 1983009808
        %v975 = vunpack.c.0.s8 %v974
        %v976 = vlaneseq
        %v977 = vshrl.u32 %v976, 7
        %v978 = vsub.s32 %v975, %v977
        %v979 = vrot.slane %v929, %v978
        %v981 = vunpack.c.l.s4 1983009808
        %v982 = vunpack.c.0.s8 %v981
        %v983 = vlaneseq
        %v984 = vshrl.u32 %v983, 7
        %v985 = vsub.s32 %v982, %v984
        %v986 = vrot.slane %v930, %v985
        %v988 = vunpack.c.l.s4 1983009808
        %v989 = vunpack.c.0.s8 %v988
        %v990 = vlaneseq
        %v991 = vshrl.u32 %v990, 7
        %v992 = vsub.s32 %v989, %v991
        %v993 = vrot.slane %v931, %v992
        %v995 = vunpack.c.l.s4 1983009808
        %v996 = vunpack.c.0.s8 %v995
        %v997 = vlaneseq
        %v998 = vshrl.u32 %v997, 7
        %v999 = vsub.s32 %v996, %v998
        %v1000 = vrot.slane %v932, %v999
        %v1002 = vunpack.c.l.s4 1983009808
        %v1003 = vunpack.c.0.s8 %v1002
        %v1004 = vlaneseq
        %v1005 = vshrl.u32 %v1004, 7
        %v1006 = vsub.s32 %v1003, %v1005
        %v1007 = vrot.slane %v933, %v1006
        %v1009 = vunpack.c.l.s4 1983009808
        %v1010 = vunpack.c.0.s8 %v1009
        %v1011 = vlaneseq
        %v1012 = vshrl.u32 %v1011, 7
        %v1013 = vsub.s32 %v1010, %v1012
        %v1014 = vrot.slane %v934, %v1013
        %v1016 = vunpack.c.l.s4 1983009808
        %v1017 = vunpack.c.0.s8 %v1016
        %v1018 = vlaneseq
        %v1019 = vshrl.u32 %v1018, 7
        %v1020 = vsub.s32 %v1017, %v1019
        %v1021 = vrot.slane %v935, %v1020
        %v1023 = vunpack.c.l.s4 1983009808
        %v1024 = vunpack.c.0.s8 %v1023
        %v1025 = vlaneseq
        %v1026 = vshrl.u32 %v1025, 7
        %v1027 = vsub.s32 %v1024, %v1026
        %v1028 = vrot.slane %v936, %v1027
        %v1030 = vunpack.c.l.s4 1983009808
        %v1031 = vunpack.c.0.s8 %v1030
        %v1032 = vlaneseq
        %v1033 = vshrl.u32 %v1032, 7
        %v1034 = vsub.s32 %v1031, %v1033
        %v1035 = vrot.slane %v937, %v1034
        %v1037 = vunpack.c.l.s4 1983009808
        %v1038 = vunpack.c.0.s8 %v1037
        %v1039 = vlaneseq
        %v1040 = vshrl.u32 %v1039, 7
        %v1041 = vsub.s32 %v1038, %v1040
        %v1042 = vrot.slane %v938, %v1041
        %v1044 = vunpack.c.l.s4 1983009808
        %v1045 = vunpack.c.0.s8 %v1044
        %v1046 = vlaneseq
        %v1047 = vshrl.u32 %v1046, 7
        %v1048 = vsub.s32 %v1045, %v1047
        %v1049 = vrot.slane %v939, %v1048
        %v1051 = vunpack.c.l.s4 1983009808
        %v1052 = vunpack.c.0.s8 %v1051
        %v1053 = vlaneseq
        %v1054 = vshrl.u32 %v1053, 7
        %v1055 = vsub.s32 %v1052, %v1054
        %v1056 = vrot.slane %v940, %v1055
        %v1058 = vunpack.c.l.s4 1983009808
        %v1059 = vunpack.c.0.s8 %v1058
        %v1060 = vlaneseq
        %v1061 = vshrl.u32 %v1060, 7
        %v1062 = vsub.s32 %v1059, %v1061
        %v1063 = vrot.slane %v941, %v1062
        %v1065 = vunpack.c.l.s4 1983009808
        %v1066 = vunpack.c.0.s8 %v1065
        %v1067 = vlaneseq
        %v1068 = vshrl.u32 %v1067, 7
        %v1069 = vsub.s32 %v1066, %v1068
        %v1070 = vrot.slane %v942, %v1069
        %v1071 = vunpack.c.l.b16 %v965
        %v1072 = vunpack.c.l.b16 %v972
        %v1073 = vunpack.c.l.b16 %v979
        %v1074 = vunpack.c.l.b16 %v986
        %v1075 = vunpack.c.l.b16 %v993
        %v1076 = vunpack.c.l.b16 %v1000
        %v1077 = vunpack.c.l.b16 %v1007
        %v1078 = vunpack.c.l.b16 %v1014
        %v1079 = vunpack.c.l.b16 %v1021
        %v1080 = vunpack.c.l.b16 %v1028
        %v1081 = vunpack.c.l.b16 %v1035
        %v1082 = vunpack.c.l.b16 %v1042
        %v1083 = vunpack.c.l.b16 %v1049
        %v1084 = vunpack.c.l.b16 %v1056
        %v1085 = vunpack.c.l.b16 %v1063
        %v1086 = vunpack.c.l.b16 %v1070
        %v1087 = vrot.slane %v1071, 2
        %v1088 = vrot.slane %v1072, 1
        %v1089 = vsel %vm367, %v1088, %v1087
        %v1090 = vsel %vm370, %v1073, %v1089
        %v1091 = vrot.slane %v1074, 7
        %v1092 = vsel %vm373, %v1091, %v1090
        %v1093 = vrot.slane %v1075, 6
        %v1094 = vsel %vm376, %v1093, %v1092
        %v1095 = vrot.slane %v1076, 5
        %v1096 = vsel %vm379, %v1095, %v1094
        %v1097 = vrot.slane %v1077, 4
        %v1098 = vsel %vm382, %v1097, %v1096
        %v1099 = vrot.slane %v1078, 3
        %v1100 = vsel %vm385, %v1099, %v1098
        %v1101 = vrot.slane %v1079, 2
        %v1102 = vrot.slane %v1080, 1
        %v1103 = vsel %vm367, %v1102, %v1101
        %v1104 = vsel %vm370, %v1081, %v1103
        %v1105 = vrot.slane %v1082, 7
        %v1106 = vsel %vm373, %v1105, %v1104
        %v1107 = vrot.slane %v1083, 6
        %v1108 = vsel %vm376, %v1107, %v1106
        %v1109 = vrot.slane %v1084, 5
        %v1110 = vsel %vm379, %v1109, %v1108
        %v1111 = vrot.slane %v1085, 4
        %v1112 = vsel %vm382, %v1111, %v1110
        %v1113 = vrot.slane %v1086, 3
        %v1114 = vsel %vm385, %v1113, %v1112
        %v1115 = vpack.c.b16 %v1114, %v1100
        %v1117 = vsel %vm463, %v1115, 0
        %1119 = vmatprep.subr.bf16.mxu0 %v443
        %1120 = vmatpush1.bf16.msra.mxu0 %v442
        %1121 = vmatprep.subr.bf16.mxu0 %v446
        %1122 = vmatpush1.bf16.msra.mxu0 %v445
        %1123 = vmatprep.subr.bf16.mxu0 %v449
        %1124 = vmatpush1.bf16.msra.mxu0 %v448
        %1125 = vmatprep.subr.bf16.mxu0 %v472
        %1126 = vmatpush1.bf16.msra.mxu0 %v469
        %1127 = vmatprep.subr.bf16.mxu0 0
        %1128 = vmatpush1.bf16.msra.mxu0 0
        %1129 = vmatprep.subr.bf16.mxu0 0
        %1130 = vmatpush1.bf16.msra.mxu0 0
        %1131 = vmatprep.subr.bf16.mxu0 0
        %1132 = vmatpush1.bf16.msra.mxu0 0
        %1133 = vmatprep.subr.bf16.mxu0 0
        %1134 = vmatpush1.bf16.msra.mxu0 0
        %1135 = vmatprep.subr.bf16.mxu0 0
        %1136 = vmatpush1.bf16.msra.mxu0 0
        %1137 = vmatprep.subr.bf16.mxu0 0
        %1138 = vmatpush1.bf16.msra.mxu0 0
        %1139 = vmatprep.subr.bf16.mxu0 0
        %1140 = vmatpush1.bf16.msra.mxu0 0
        %1141 = vmatprep.subr.bf16.mxu0 0
        %1142 = vmatpush1.bf16.msra.mxu0 0
        %1143 = vmatprep.subr.bf16.mxu0 0
        %1144 = vmatpush1.bf16.msra.mxu0 0
        %1145 = vmatprep.subr.bf16.mxu0 0
        %1146 = vmatpush1.bf16.msra.mxu0 0
        %1147 = vmatprep.subr.bf16.mxu0 0
        %1148 = vmatpush1.bf16.msra.mxu0 0
        %1149 = vmatprep.subr.bf16.mxu0 0
        %1150 = vmatpush1.bf16.msra.mxu0 0
        %1151 = vmatprep.mubr.bf16.mxu0 0
        %1152 = vmatmul.mubr.bf16.gmra.mrb[0].mxu0 %v1117
        %v1153 = vpop.f32.mrb[0].mxu0
        %v1154 = vadd.f32 %v194, %v1153
        %v1155 = vpop.f32.mrb[0].mxu0
        %v1156 = vadd.f32 %v198, %v1155
        %v1157 = vpop.f32.mrb[0].mxu0
        %v1158 = vadd.f32 %v194, %v1157
        %v1159 = vpop.f32.mrb[0].mxu0
        %v1160 = vadd.f32 %v198, %v1159
        %1161 = vdwg.mxu0
        %1162 = vmatprep.subr.bf16.mxu0 0
        %1163 = vmatpush1.bf16.msra.mxu0 %v444
        %1164 = vmatprep.subr.bf16.mxu0 0
        %1165 = vmatpush1.bf16.msra.mxu0 %v447
        %1166 = vmatprep.subr.bf16.mxu0 0
        %1167 = vmatpush1.bf16.msra.mxu0 %v450
        %1168 = vmatprep.subr.bf16.mxu0 0
        %1169 = vmatpush1.bf16.msra.mxu0 %v475
        %1170 = vmatprep.subr.bf16.mxu0 0
        %1171 = vmatpush1.bf16.msra.mxu0 0
        %1172 = vmatprep.subr.bf16.mxu0 0
        %1173 = vmatpush1.bf16.msra.mxu0 0
        %1174 = vmatprep.subr.bf16.mxu0 0
        %1175 = vmatpush1.bf16.msra.mxu0 0
        %1176 = vmatprep.subr.bf16.mxu0 0
        %1177 = vmatpush1.bf16.msra.mxu0 0
        %1178 = vmatprep.subr.bf16.mxu0 0
        %1179 = vmatpush1.bf16.msra.mxu0 0
        %1180 = vmatprep.subr.bf16.mxu0 0
        %1181 = vmatpush1.bf16.msra.mxu0 0
        %1182 = vmatprep.subr.bf16.mxu0 0
        %1183 = vmatpush1.bf16.msra.mxu0 0
        %1184 = vmatprep.subr.bf16.mxu0 0
        %1185 = vmatpush1.bf16.msra.mxu0 0
        %1186 = vmatprep.subr.bf16.mxu0 0
        %1187 = vmatpush1.bf16.msra.mxu0 0
        %1188 = vmatprep.subr.bf16.mxu0 0
        %1189 = vmatpush1.bf16.msra.mxu0 0
        %1190 = vmatprep.subr.bf16.mxu0 0
        %1191 = vmatpush1.bf16.msra.mxu0 0
        %1192 = vmatprep.subr.bf16.mxu0 0
        %1193 = vmatpush1.bf16.msra.mxu0 0
        %1194 = vmatprep.mubr.bf16.mxu0 0
        %1195 = vmatmul.mubr.bf16.gmra.mrb[0].mxu0 %v1117
        %v1196 = vpop.f32.mrb[0].mxu0
        %v1197 = vadd.f32 %v202, %v1196
        %v1198 = vpop.f32.mrb[0].mxu0
        %v1199 = vpop.f32.mrb[0].mxu0
        %v1200 = vadd.f32 %v202, %v1199
        %v1201 = vpop.f32.mrb[0].mxu0
        %1202 = vdwg.mxu0
        %v1203 = vxor.u32 %v1154, 2147483648
        %v1204 = vxor.u32 %v1156, 2147483648
        %v1205 = vxor.u32 %v1197, 2147483648
        %v1206 = vxor.u32 %v1158, 2147483648
        %v1207 = vxor.u32 %v1160, 2147483648
        %v1208 = vxor.u32 %v1200, 2147483648
        %v1209 = vmul.f32 %v1203, 1.442695
        %v1210 = vpow.pop %v1209
        %v1211 = vmul.f32 %v1204, 1.442695
        %v1212 = vpow.pop %v1211
        %v1213 = vmul.f32 %v1205, 1.442695
        %v1214 = vpow.pop %v1213
        %v1215 = vmul.f32 %v1206, 1.442695
        %v1216 = vpow.pop %v1215
        %v1217 = vmul.f32 %v1207, 1.442695
        %v1218 = vpow.pop %v1217
        %v1219 = vmul.f32 %v1208, 1.442695
        %v1220 = vpow.pop %v1219
        %v1221 = vadd.f32 %v1210, 1.0
        %v1222 = vadd.f32 %v1212, 1.0
        %v1223 = vadd.f32 %v1214, 1.0
        %v1224 = vadd.f32 %v1216, 1.0
        %v1225 = vadd.f32 %v1218, 1.0
        %v1226 = vadd.f32 %v1220, 1.0
        %v1227 = vrcp.pop %v1221
        %v1228 = vmul.f32 1.0, %v1227
        %v1229 = vrcp.pop %v1222
        %v1230 = vmul.f32 1.0, %v1229
        %v1231 = vrcp.pop %v1223
        %v1232 = vmul.f32 1.0, %v1231
        %v1233 = vrcp.pop %v1224
        %v1234 = vmul.f32 1.0, %v1233
        %v1235 = vrcp.pop %v1225
        %v1236 = vmul.f32 1.0, %v1235
        %v1237 = vrcp.pop %v1226
        %v1238 = vmul.f32 1.0, %v1237
        %v1239 = vmul.f32 %v1154, %v1228
        %v1240 = vmul.f32 %v1156, %v1230
        %v1241 = vmul.f32 %v1197, %v1232
        %v1242 = vmul.f32 %v1158, %v1234
        %v1243 = vmul.f32 %v1160, %v1236
        %v1244 = vmul.f32 %v1200, %v1238
        %v1245 = vmax.f32 %v921, %v1239
        %v1246 = vmax.f32 %v922, %v1240
        %v1247 = vmax.f32 %v923, %v1241
        %v1248 = vmax.f32 %v924, %v1242
        %v1249 = vmax.f32 %v925, %v1243
        %v1250 = vmax.f32 %v926, %v1244
        %1251 = vst [vmem:[%s164] sm:$0xff] %v1245
        %1252 = vst [vmem:[%s164 + $0x8] sm:$0xff] %v1246
        %vm1253 = vcmask 523264
        %1254 = vst.msk [vmem:[%s164 + $0x10] sm:$0xff] %vm1253, %v1247
        %1255 = vst [vmem:[%s164 + $0x18] sm:$0xff] %v1248
        %1256 = vst [vmem:[%s164 + $0x20] sm:$0xff] %v1249
        %1257 = vst.msk [vmem:[%s164 + $0x28] sm:$0xff] %vm1253, %v1250
        %s1258 = sand.u32 %s93, 1
        %s1259 = scalar_lea.sflag [#allocation3], %s1258
        %s1260 = sand.u32 %s93, 1
        %s1261 = smul.addr %s1260, 48
        %s1262 = scalar_lea.vmem [#allocation2], %s1261
        // Predicated region
        $region33: #{tpu_custom_call.1} parent=31 // pred_check
          %p1263 = pneg %p103
        $region34: #{tpu_custom_call.1} parent=31 // pred_check_branch
          %1265 = sbr.rel (%p1263) target = $region36
        $region35: #{tpu_custom_call.1} parent=31 // pred_region
          %s1266 = smul.u32 2, %s17
          %s1268 = ssub.s32 768, 768
          %1269 = vsyncadd %s1259, %s1268
          %s1270 = smul.addr %s1266, 3
          %s1271 = smul.addr %s1270, 128
          %s1272 = scalar_lea.hbm %s3, %s1271
          %s1273 = sshll.u32 %s1262, 4
          %s1274 = int_to_ptr.vmem [resolvable:$true] %s1273
          %1279 = dma.vmem_to_hbm [thread:$0]  %s1274, 768, %s1272, %s1259, 384, 384, 24
        $region36: #{tpu_custom_call.1} parent=31 // pred_fallthru
          _
      $region32: #{tpu_custom_call.1} parent=5 // pred_fallthru
        _
      %p1280 = scmp.le.s32.totalorder 2, %s12
      // Predicated region
      $region37: #{tpu_custom_call.1} parent=5 // pred_check
        %p1281 = pneg %p1280
      $region38: #{tpu_custom_call.1} parent=5 // pred_check_branch
        %1283 = sbr.rel (%p1281) target = $region40
      $region39: #{tpu_custom_call.1} parent=5 // pred_region
        %s1284 = ssub.s32 %s12, 2
        // Predicated region
        $region41: #{tpu_custom_call.1} parent=39 // pred_check
          %p1285 = pneg %p109
        $region42: #{tpu_custom_call.1} parent=39 // pred_check_branch
          %1287 = sbr.rel (%p1285) target = $region44
        $region43: #{tpu_custom_call.1} parent=39 // pred_region
          %s1288 = sand.u32 %s94, 1
          %s1289 = scalar_lea.sflag [#allocation3], %s1288
          %s1290 = sand.u32 %s94, 1
          %s1291 = smul.addr %s1290, 48
          %s1292 = scalar_lea.vmem [#allocation2], %s1291
          %1293 = dma.done %s1289, 768
        $region44: #{tpu_custom_call.1} parent=39 // pred_fallthru
          _
      $region40: #{tpu_custom_call.1} parent=5 // pred_fallthru
        _
    $region6: #{tpu_custom_call.1} parent=1 // loop_footer
      %s16 = sadd.s32 1, %s12
    $region7: #{tpu_custom_call.1} parent=1 // loop_footer_branch
      %11 = sbr.rel target = $region3
    $region8: #{tpu_custom_call.1} parent=1 // loop_exit
      _
    %1294 = vsyncpa [#allocation3], 1
    %s1295 = scalar_lea.sflag [#allocation3], 1
    %1296 = vsyncpa %s1295, 1

</llo_original>
